<compile_context>
chip_gen: v6e
topology: v6e:2x2x1
jax: 0.10.0
libtpu: 0.0.40
codegen_flags: <defaults>
</compile_context>

<pallas_src>
import functools

import jax
import jax.numpy as jnp
from jax import lax
from jax.experimental import pallas as pl
from jax.experimental.pallas import tpu as pltpu


_LANES = 128


# ----------------------------------------------------------------------------
# Generation-aware VMEM budget
# ----------------------------------------------------------------------------
@functools.lru_cache(maxsize=1)
def _vmem_budget_bytes():
    """Scoped-VMEM budget to request: ~3/4 of physical VMEM, capped at 100 MiB.

    v7x (64 MiB physical) -> 48 MiB; v5e/v6e (128 MiB physical) -> 96 MiB.
    Falls back to the conservative v7x figure if the query is unavailable.
    """
    phys = 64 << 20
    try:
        info = pltpu.get_tpu_info()
        phys = int(getattr(info, "vmem_capacity_bytes", phys))
    except Exception:
        pass
    return max(24 << 20, min((phys * 3) // 4, 100 << 20))


# ----------------------------------------------------------------------------
# Kernels
# ----------------------------------------------------------------------------
def _excitation(mean, w1_t, w2):
    """fc1 -> ReLU -> fc2 -> sigmoid on a (C, 1) channel-mean vector.

    Broadcast-multiplies + cross-sublane / cross-lane reductions (VPU/XLU);
    the C x C//r weights are far too small to be worth MXU padding.
    """
    h = jnp.maximum(jnp.sum(mean * w1_t, axis=0, keepdims=True), 0.0)   # (1, Cr)
    y = jnp.sum(w2 * h, axis=1, keepdims=True)                          # (C, 1)
    return jax.nn.sigmoid(y)                                            # (C, 1)


def _se_fused_kernel(x_ref, w1_ref, w2_ref, o_ref, *, inv_s):
    """Single-pass SE for one batch element kept resident in VMEM.

    x_ref: (1, C, S); w1_ref: (C, Cr) = fc1.weight.T; w2_ref: (C, Cr); o_ref: (1, C, S)
    """
    xt = x_ref[0]                                                        # (C, S)
    mean = jnp.sum(xt.astype(jnp.float32), axis=-1, keepdims=True) * inv_s
    scale = _excitation(mean, w1_ref[...], w2_ref[...])                  # (C, 1) f32
    o_ref[0] = (xt * scale).astype(o_ref.dtype)


def _se_squeeze_kernel(x_ref, w1_ref, w2_ref, scale_ref, acc_ref, *,
                       inv_s, total_s, needs_mask):
    """Tiled global-avg-pool fused with the excitation MLP (two-pass path).

    x_ref:     (1, C, tile_S)  one spatial tile of one batch element
    scale_ref: (1, C, 1)       output: per-channel sigmoid gate for this batch
    acc_ref:   (C, 128) f32    VMEM scratch: lane-wide running sums (VPU adds
                               per 128-lane group; single XLU reduce in finalize)
    """
    s = pl.program_id(1)
    c = x_ref.shape[1]
    tile_s = x_ref.shape[2]
    n_groups = tile_s // _LANES

    @pl.when(s == 0)
    def _init():
        acc_ref[...] = jnp.zeros_like(acc_ref)

    if needs_mask:
        lane = lax.broadcasted_iota(jnp.int32, (c, _LANES), 1)   # hoisted out of loop
        base = s * tile_s

    def body(g, acc):
        off = pl.multiple_of(g * _LANES, _LANES)
        chunk = x_ref[0, :, pl.ds(off, _LANES)].astype(jnp.float32)      # (C, 128)
        if needs_mask:
            chunk = jnp.where(base + off + lane < total_s, chunk, 0.0)
        return acc + chunk

    acc_ref[...] = lax.fori_loop(0, n_groups, body, acc_ref[...])

    @pl.when(s == pl.num_programs(1) - 1)
    def _finalize():
        mean = jnp.sum(acc_ref[...], axis=-1, keepdims=True) * inv_s     # (C, 1)
        scale_ref[0] = _excitation(mean, w1_ref[...], w2_ref[...])


def _se_excite_kernel(x_ref, scale_ref, o_ref):
    """out = x * scale (per-channel broadcast over the spatial/lane axis)."""
    o_ref[...] = (x_ref[...] * scale_ref[...]).astype(o_ref.dtype)


# ----------------------------------------------------------------------------
# pallas_call wrappers
# ----------------------------------------------------------------------------
def _choose_tile_s(S, C, itemsize, target_block_bytes):
    """Pick a multiple-of-128 spatial tile (dtype-aware). Prefers a tile that
    divides S; otherwise the near-max tile is used with a cdiv grid + masked
    last tile (never falls back to a full-S block)."""
    max_ts = max(_LANES, (target_block_bytes // max(1, itemsize * C)) // _LANES * _LANES)
    s_up = pl.cdiv(S, _LANES) * _LANES
    if s_up <= max_ts:
        return s_up                                  # one (possibly masked) tile
    t = max_ts
    while t >= _LANES:
        if S % t == 0:
            return t                                 # exact divisor: no masking
        t -= _LANES
    return max_ts                                    # masked last tile


def se_fused(x3, w1_t, w2, *, vmem_limit, donate_x=False):
    """Single pallas_call SE: x3 (B, C, S) -> (B, C, S). One read + one write of x."""
    B, C, S = x3.shape
    Cr = w1_t.shape[1]
    kernel = functools.partial(_se_fused_kernel, inv_s=1.0 / S)
    return pl.pallas_call(
        kernel,
        out_shape=jax.ShapeDtypeStruct((B, C, S), x3.dtype),
        grid_spec=pltpu.PrefetchScalarGridSpec(
            num_scalar_prefetch=0,
            grid=(B,),
            in_specs=[
                pl.BlockSpec((1, C, S), lambda b: (b, 0, 0)),
                pl.BlockSpec((C, Cr), lambda b: (0, 0)),
                pl.BlockSpec((C, Cr), lambda b: (0, 0)),
            ],
            out_specs=pl.BlockSpec((1, C, S), lambda b: (b, 0, 0)),
        ),
        input_output_aliases=({0: 0} if donate_x else {}),
        compiler_params=pltpu.CompilerParams(
            dimension_semantics=("parallel",),
            vmem_limit_bytes=vmem_limit),
    )(x3, w1_t, w2)


def se_squeeze(x3, w1_t, w2, tile_s, *, vmem_limit):
    """x3: (B, C, S) -> per-channel gates (B, C, 1) f32 (two-pass path)."""
    B, C, S = x3.shape
    Cr = w1_t.shape[1]
    if tile_s % _LANES != 0:
        raise ValueError(f"tile_s must be a multiple of {_LANES}, got {tile_s}")
    n_s = pl.cdiv(S, tile_s)
    needs_mask = (S % tile_s) != 0
    kernel = functools.partial(_se_squeeze_kernel, inv_s=1.0 / S,
                               total_s=S, needs_mask=needs_mask)
    return pl.pallas_call(
        kernel,
        out_shape=jax.ShapeDtypeStruct((B, C, 1), jnp.float32),
        grid_spec=pltpu.PrefetchScalarGridSpec(
            num_scalar_prefetch=0,
            grid=(B, n_s),                                   # reduction axis last
            in_specs=[
                pl.BlockSpec((1, C, tile_s), lambda b, s: (b, 0, s)),
                pl.BlockSpec((C, Cr), lambda b, s: (0, 0)),
                pl.BlockSpec((C, Cr), lambda b, s: (0, 0)),
            ],
            out_specs=pl.BlockSpec((1, C, 1), lambda b, s: (b, 0, 0)),
            scratch_shapes=[pltpu.VMEM((C, _LANES), jnp.float32)],
        ),
        compiler_params=pltpu.CompilerParams(
            dimension_semantics=("parallel", "arbitrary"),
            vmem_limit_bytes=vmem_limit),
    )(x3, w1_t, w2)


def se_excite(x3, scale, tile_s, *, vmem_limit, donate_x=False):
    """x3: (B, C, S); scale: (B, C, 1) -> (B, C, S) (two-pass path)."""
    B, C, S = x3.shape
    if tile_s % _LANES != 0:
        raise ValueError(f"tile_s must be a multiple of {_LANES}, got {tile_s}")
    n_s = pl.cdiv(S, tile_s)
    return pl.pallas_call(
        _se_excite_kernel,
        out_shape=jax.ShapeDtypeStruct((B, C, S), x3.dtype),
        grid_spec=pltpu.PrefetchScalarGridSpec(
            num_scalar_prefetch=0,
            grid=(B, n_s),
            in_specs=[
                pl.BlockSpec((1, C, tile_s), lambda b, s: (b, 0, s)),
                pl.BlockSpec((1, C, 1), lambda b, s: (b, 0, 0)),
            ],
            out_specs=pl.BlockSpec((1, C, tile_s), lambda b, s: (b, 0, s)),
        ),
        input_output_aliases=({0: 0} if donate_x else {}),
        compiler_params=pltpu.CompilerParams(
            dimension_semantics=("parallel", "parallel"),
            vmem_limit_bytes=vmem_limit),
    )(x3, scale)


# ----------------------------------------------------------------------------
# Full forward pass
# ----------------------------------------------------------------------------
def se_block_3d(x, params, *, tile_s=None, force_two_pass=False, donate_x=False):
    """x: (B, C, H, W, D) -> (B, C, H, W, D). Matches PyTorch SEBlock3D.forward.

    donate_x=True aliases the output onto x (only if the caller donates x to jit,
    otherwise XLA inserts a defensive copy)."""
    B, C = x.shape[0], x.shape[1]
    S = 1
    for d in x.shape[2:]:
        S *= d
    x3 = x.reshape(B, C, S)                  # contiguous reshape, no transpose
    itemsize = jnp.dtype(x.dtype).itemsize
    budget = _vmem_budget_bytes()
    slab_bytes = C * S * itemsize

    # Fused single-pass path when the per-batch slab comfortably fits VMEM
    # (double-buffered in+out + f32 working values ~ 6x slab).
    if (not force_two_pass) and (tile_s is None) and (slab_bytes * 6 <= budget):
        out3 = se_fused(x3, params["w1_t"], params["w2"],
                        vmem_limit=budget, donate_x=donate_x)
        return out3.reshape(x.shape)

    # Two-pass tiled fallback.
    if tile_s is None:
        target_block = max(512 << 10, min(budget // 8, 8 << 20))
        tile_s = _choose_tile_s(S, C, itemsize, target_block)
    # TODO(synk): when B == 1 on v7x, split S across an extra "parallel" grid axis
    # (per-core partial sums combined outside the kernel) so both TensorCores work
    # during the squeeze pass.
    scale = se_squeeze(x3, params["w1_t"], params["w2"], tile_s,
                       vmem_limit=budget)                                # (B, C, 1)
    out3 = se_excite(x3, scale, tile_s, vmem_limit=budget,
                     donate_x=donate_x)                                  # (B, C, S)
    return out3.reshape(x.shape)


def init_params(key, channels, reduction=16):
    """Weights stored in kernel layout (hoisted out of the forward pass):
    w1_t = fc1.weight.T with shape (C, C//r); w2 = fc2.weight with shape (C, C//r)."""
    cr = max(channels // reduction, 1)
    k1, k2 = jax.random.split(key)
    fc1_w = jax.random.normal(k1, (cr, channels), jnp.float32) / jnp.sqrt(channels)
    fc2_w = jax.random.normal(k2, (channels, cr), jnp.float32) / jnp.sqrt(cr)
    return {"w1_t": jnp.transpose(fc1_w), "w2": fc2_w}


if __name__ == "__main__":
    key = jax.random.PRNGKey(0)
    kx, kp, kx2 = jax.random.split(key, 3)

    # Small demo shapes: B=2, C=32 (reduction=16 -> hidden=2), 16^3 volume (S=4096).
    B, C, H, W, D = 2, 32, 16, 16, 16
    x = jax.random.normal(kx, (B, C, H, W, D), jnp.float32)
    params = init_params(kp, channels=C, reduction=16)

    def ref_fn(xa, p):
        b, c = xa.shape[:2]
        m = xa.reshape(b, c, -1).mean(-1)                          # (B, C)
        h = jnp.maximum(m @ p["w1_t"], 0.0)                        # fc1 + ReLU
        s = jax.nn.sigmoid(h @ p["w2"].T)                          # fc2 + sigmoid
        return xa * s[:, :, None, None, None]

    # 1) Fused single-pass path (per-batch slab fits VMEM).
    y_fused = jax.jit(se_block_3d)(x, params)
    jax.block_until_ready(y_fused)

    # 2) Two-pass tiled path (forced): exercises the cross-tile (C,128) reduction.
    fwd_tiled = jax.jit(functools.partial(se_block_3d, force_two_pass=True, tile_s=1024))
    y_tiled = fwd_tiled(x, params)
    jax.block_until_ready(y_tiled)

    # 3) Two-pass path with a masked, non-dividing last tile (S = 600, tile = 256).
    x_odd = jax.random.normal(kx2, (B, C, 6, 10, 10), jnp.float32)
    fwd_odd = jax.jit(functools.partial(se_block_3d, force_two_pass=True, tile_s=256))
    y_odd = fwd_odd(x_odd, params)
    jax.block_until_ready(y_odd)

    for got, inp in ((y_fused, x), (y_tiled, x), (y_odd, x_odd)):
        want = ref_fn(inp, params)
        assert got.shape == inp.shape, (got.shape, inp.shape)
        assert bool(jnp.all(jnp.isfinite(got)))
        assert bool(jnp.allclose(got, want, atol=1e-5, rtol=1e-4)), \
            float(jnp.max(jnp.abs(got - want)))

    print("KERNEL_OK")
</pallas_src>

<mosaic_0001>
module attributes {stable_mosaic.version = 11 : i64} {
  func.func @_se_fused_kernel(%arg0: i32, %arg1: memref<1x32x4096xf32, #tpu.memory_space<vmem>>, %arg2: memref<32x2xf32, #tpu.memory_space<vmem>>, %arg3: memref<32x2xf32, #tpu.memory_space<vmem>>, %arg4: memref<1x32x4096xf32, #tpu.memory_space<vmem>>) attributes {dimension_semantics = [#tpu.dimension_semantics<parallel>], iteration_bounds = array<i64: 2>, scalar_prefetch = 0 : i64, scratch_operands = 0 : i64, tpu.core_type = #tpu.core_type<tc>, window_params = [{transform_indices = @transform_0, window_bounds = array<i64: 1, 32, 4096>}, {pipeline_mode = #tpu.pipeline_mode<synchronous>, transform_indices = @transform_1, window_bounds = array<i64: 32, 2>}, {pipeline_mode = #tpu.pipeline_mode<synchronous>, transform_indices = @transform_2, window_bounds = array<i64: 32, 2>}, {transform_indices = @transform_3, window_bounds = array<i64: 1, 32, 4096>}]} {
    %c0 = arith.constant 0 : index
    %c0_0 = arith.constant 0 : index
    %c0_1 = arith.constant 0 : index
    %0 = vector.load %arg1[%c0, %c0_0, %c0_1] : memref<1x32x4096xf32, #tpu.memory_space<vmem>>, vector<1x32x4096xf32>
    %1 = vector.shape_cast %0 : vector<1x32x4096xf32> to vector<32x4096xf32>
    %cst = arith.constant dense<0.000000e+00> : vector<32xf32>
    %2 = vector.multi_reduction <add>, %1, %cst [1] : vector<32x4096xf32> to vector<32xf32>
    %3 = vector.shape_cast %2 : vector<32xf32> to vector<32x1xf32>
    %cst_2 = arith.constant 2.44140625E-4 : f32
    %4 = vector.broadcast %cst_2 : f32 to vector<32x1xf32>
    %5 = arith.mulf %3, %4 : vector<32x1xf32>
    %c0_3 = arith.constant 0 : index
    %c0_4 = arith.constant 0 : index
    %6 = vector.load %arg2[%c0_3, %c0_4] : memref<32x2xf32, #tpu.memory_space<vmem>>, vector<32x2xf32>
    %c0_5 = arith.constant 0 : index
    %c0_6 = arith.constant 0 : index
    %7 = vector.load %arg3[%c0_5, %c0_6] : memref<32x2xf32, #tpu.memory_space<vmem>>, vector<32x2xf32>
    %8 = vector.broadcast %5 : vector<32x1xf32> to vector<32x2xf32>
    %9 = arith.mulf %8, %6 : vector<32x2xf32>
    %cst_7 = arith.constant dense<0.000000e+00> : vector<2xf32>
    %10 = vector.multi_reduction <add>, %9, %cst_7 [0] : vector<32x2xf32> to vector<2xf32>
    %11 = vector.shape_cast %10 : vector<2xf32> to vector<1x2xf32>
    %cst_8 = arith.constant 0.000000e+00 : f32
    %12 = vector.broadcast %cst_8 : f32 to vector<1x2xf32>
    %13 = arith.maximumf %11, %12 : vector<1x2xf32>
    %14 = vector.broadcast %13 : vector<1x2xf32> to vector<32x2xf32>
    %15 = arith.mulf %7, %14 : vector<32x2xf32>
    %cst_9 = arith.constant dense<0.000000e+00> : vector<32xf32>
    %16 = vector.multi_reduction <add>, %15, %cst_9 [1] : vector<32x2xf32> to vector<32xf32>
    %17 = vector.shape_cast %16 : vector<32xf32> to vector<32x1xf32>
    %18 = arith.negf %17 : vector<32x1xf32>
    %19 = math.exp %18 : vector<32x1xf32>
    %cst_10 = arith.constant 1.000000e+00 : f32
    %20 = vector.broadcast %cst_10 : f32 to vector<32x1xf32>
    %21 = arith.addf %20, %19 : vector<32x1xf32>
    %22 = arith.divf %20, %21 : vector<32x1xf32>
    %23 = vector.broadcast %22 : vector<32x1xf32> to vector<32x4096xf32>
    %24 = arith.mulf %1, %23 : vector<32x4096xf32>
    %c0_11 = arith.constant 0 : index
    %c0_12 = arith.constant 0 : index
    %c0_13 = arith.constant 0 : index
    %25 = vector.load %arg4[%c0_11, %c0_12, %c0_13] : memref<1x32x4096xf32, #tpu.memory_space<vmem>>, vector<1x32x4096xf32>
    %26 = vector.shape_cast %25 : vector<1x32x4096xf32> to vector<32x4096xf32>
    %27 = vector.shape_cast %24 : vector<32x4096xf32> to vector<1x32x4096xf32>
    tpu.vector_store %arg4[%c0_11, %c0_12, %c0_13], %27 {strides = array<i32>} : memref<1x32x4096xf32, #tpu.memory_space<vmem>>, vector<1x32x4096xf32>,
    return
  }
  func.func @transform_0(%arg0: i32) -> (i32, i32, i32) {
    %c0_i32 = arith.constant 0 : i32
    %c0_i32_0 = arith.constant 0 : i32
    %c0_i32_1 = arith.constant 0 : i32
    return %arg0, %c0_i32, %c0_i32_0 : i32, i32, i32
  }
  func.func @transform_1(%arg0: i32) -> (i32, i32) {
    %c0_i32 = arith.constant 0 : i32
    %c0_i32_0 = arith.constant 0 : i32
    %c0_i32_1 = arith.constant 0 : i32
    return %c0_i32, %c0_i32_0 : i32, i32
  }
  func.func @transform_2(%arg0: i32) -> (i32, i32) {
    %c0_i32 = arith.constant 0 : i32
    %c0_i32_0 = arith.constant 0 : i32
    %c0_i32_1 = arith.constant 0 : i32
    return %c0_i32, %c0_i32_0 : i32, i32
  }
  func.func @transform_3(%arg0: i32) -> (i32, i32, i32) {
    %c0_i32 = arith.constant 0 : i32
    %c0_i32_0 = arith.constant 0 : i32
    %c0_i32_1 = arith.constant 0 : i32
    return %arg0, %c0_i32, %c0_i32_0 : i32, i32, i32
  }
}

</mosaic_0001>

<llo_original>
// kernel: se_block_3d.1
$region0: #{se_block_3d.1}
  #allocation0 [shape = 'u32[]', space=smem, size = 0x4, offset = 0x4, fixed_abs, tag = 'smem constant byte address 0x4 - core index']
  #allocation1 [shape = 'u32[144,128]{1,0:T(1,128)}', space=vmem, size = 0x12000, scoped, tag = 'internal scratch']
  %s0 = inlined_call_operand.vmem [shape: f32[2,32,4096], index: 0, kind: input, shape index: {}]
  %s1 = inlined_call_operand.vmem [shape: f32[32,2], index: 1, kind: input, shape index: {}]
  %s2 = inlined_call_operand.vmem [shape: f32[32,2], index: 2, kind: input, shape index: {}]
  %s3 = inlined_call_operand.vmem [shape: f32[2,32,4096], index: 3, kind: output, shape index: {}]
  %s4 = sld [smem:[#allocation0]]
  $region45: #{se_block_3d.1} parent=0
    _
  %s6 = ssub.s32 1, %s4
  %s7 = scalar_select 0, %s6, %s4
  loop: start=0, step=1, limit=4
  $region2: #{se_block_3d.1} parent=0 // loop_pre_header
    _
  $region3: #{se_block_3d.1} parent=0 // loop_header
    %s9 = sphi 0, %s13
    %p10 = scmp.ge.s32.totalorder %s9, 4
    %s19 = sphi 0, %s21
    %s22 = sphi 0, %s19
    %s23 = sphi 0, %s22
    %s39 = sphi 0, %s23
    %s43 = sphi 0, %s43
    %s45 = sphi 0, %s43
    %s46 = sphi 0, %s45
    %s60 = sphi 0, %s46
    %s64 = sphi 0, %s64
    %s66 = sphi 0, %s64
    %s67 = sphi 0, %s66
    %s81 = sphi 0, %s67
    %s87 = sphi 0, %s89
    %s90 = sphi 0, %s87
    %s91 = sphi 0, %s90
    %s107 = sphi 0, %s91
  $region4: #{se_block_3d.1} parent=0 // loop_header_branch
    %12 = sbr.rel (%p10) target = $region8
  $region5: #{se_block_3d.1} parent=0 // loop_body
    %s14 = ssub.s32 %s9, 1
    %s15 = ssub.s32 %s9, 2
    %s16 = sadd.s32 %s9, 1
    %s17 = ssub.s32 %s9, %s16
    %p18 = scmp.eq.s32.totalorder %s17, 0
    %s20 = sadd.s32 %s19, 1
    %s21 = scalar_select %p18, %s19, %s20
    %p24 = pneg %p18
    %p25 = scmp.eq.s32.totalorder %s9, 1
    %p26 = por %p24, %p25
    %p27 = scmp.ne.s32.totalorder %s19, %s22
    %p28 = scmp.eq.s32.totalorder %s9, 0
    %p29 = por %p27, %p28
    %p30 = scmp.ne.s32.totalorder %s19, %s22
    %p31 = scmp.eq.s32.totalorder %s14, 1
    %p32 = por %p30, %p31
    %p33 = scmp.ne.s32.totalorder %s22, %s23
    %p34 = scmp.eq.s32.totalorder %s14, 0
    %p35 = por %p33, %p34
    %p36 = scmp.ne.s32.totalorder %s22, %s23
    %p37 = scmp.eq.s32.totalorder %s15, 1
    %p38 = por %p36, %p37
    %p40 = scmp.ne.s32.totalorder %s23, %s39
    %p41 = scmp.eq.s32.totalorder %s15, 0
    %p42 = por %p40, %p41
    %s44 = sadd.s32 %s43, 1
    %p47 = scmp.eq.s32.totalorder %s9, 1
    %p48 = scmp.ne.s32.totalorder %s43, %s45
    %p49 = scmp.eq.s32.totalorder %s9, 0
    %p50 = por %p48, %p49
    %p51 = scmp.ne.s32.totalorder %s43, %s45
    %p52 = scmp.eq.s32.totalorder %s14, 1
    %p53 = por %p51, %p52
    %p54 = scmp.ne.s32.totalorder %s45, %s46
    %p55 = scmp.eq.s32.totalorder %s14, 0
    %p56 = por %p54, %p55
    %p57 = scmp.ne.s32.totalorder %s45, %s46
    %p58 = scmp.eq.s32.totalorder %s15, 1
    %p59 = por %p57, %p58
    %p61 = scmp.ne.s32.totalorder %s46, %s60
    %p62 = scmp.eq.s32.totalorder %s15, 0
    %p63 = por %p61, %p62
    %s65 = sadd.s32 %s64, 1
    %p68 = scmp.eq.s32.totalorder %s9, 1
    %p69 = scmp.ne.s32.totalorder %s64, %s66
    %p70 = scmp.eq.s32.totalorder %s9, 0
    %p71 = por %p69, %p70
    %p72 = scmp.ne.s32.totalorder %s64, %s66
    %p73 = scmp.eq.s32.totalorder %s14, 1
    %p74 = por %p72, %p73
    %p75 = scmp.ne.s32.totalorder %s66, %s67
    %p76 = scmp.eq.s32.totalorder %s14, 0
    %p77 = por %p75, %p76
    %p78 = scmp.ne.s32.totalorder %s66, %s67
    %p79 = scmp.eq.s32.totalorder %s15, 1
    %p80 = por %p78, %p79
    %p82 = scmp.ne.s32.totalorder %s67, %s81
    %p83 = scmp.eq.s32.totalorder %s15, 0
    %p84 = por %p82, %p83
    %s85 = ssub.s32 %s9, %s16
    %p86 = scmp.eq.s32.totalorder %s85, 0
    %s88 = sadd.s32 %s87, 1
    %s89 = scalar_select %p86, %s87, %s88
    %p92 = pneg %p86
    %p93 = scmp.eq.s32.totalorder %s9, 1
    %p94 = por %p92, %p93
    %p95 = scmp.ne.s32.totalorder %s87, %s90
    %p96 = scmp.eq.s32.totalorder %s9, 0
    %p97 = por %p95, %p96
    %p98 = scmp.ne.s32.totalorder %s87, %s90
    %p99 = scmp.eq.s32.totalorder %s14, 1
    %p100 = por %p98, %p99
    %p101 = scmp.ne.s32.totalorder %s90, %s91
    %p102 = scmp.eq.s32.totalorder %s14, 0
    %p103 = por %p101, %p102
    %p104 = scmp.ne.s32.totalorder %s90, %s91
    %p105 = scmp.eq.s32.totalorder %s15, 1
    %p106 = por %p104, %p105
    %p108 = scmp.ne.s32.totalorder %s91, %s107
    %p109 = scmp.eq.s32.totalorder %s15, 0
    %p110 = por %p108, %p109
    %p111 = scmp.le.s32.totalorder 1, %s9
    %p112 = scmp.lt.s32.totalorder %s9, 3
    %p113 = pnand %p111, %p112
    %p114 = pneg %p113
    // Predicated region
    $region9: #{se_block_3d.1} parent=5 // pred_check
      _
    $region10: #{se_block_3d.1} parent=5 // pred_check_branch
      %116 = sbr.rel (%p113) target = $region12
    $region11: #{se_block_3d.1} parent=5 // pred_region
      %s117 = ssub.s32 %s9, 1
      // Predicated region
      $region13: #{se_block_3d.1} parent=11 // pred_check
        %p118 = pneg %p56
      $region14: #{se_block_3d.1} parent=11 // pred_check_branch
        %120 = sbr.rel (%p118) target = $region16
      $region15: #{se_block_3d.1} parent=11 // pred_region
        _
      $region16: #{se_block_3d.1} parent=11 // pred_fallthru
        _
      // Predicated region
      $region17: #{se_block_3d.1} parent=11 // pred_check
        %p121 = pneg %p77
      $region18: #{se_block_3d.1} parent=11 // pred_check_branch
        %123 = sbr.rel (%p121) target = $region20
      $region19: #{se_block_3d.1} parent=11 // pred_region
        _
      $region20: #{se_block_3d.1} parent=11 // pred_fallthru
        _
    $region12: #{se_block_3d.1} parent=5 // pred_fallthru
      _
    %p124 = scmp.lt.s32.totalorder %s9, 2
    // Predicated region
    $region21: #{se_block_3d.1} parent=5 // pred_check
      %p125 = pneg %p124
    $region22: #{se_block_3d.1} parent=5 // pred_check_branch
      %127 = sbr.rel (%p125) target = $region24
    $region23: #{se_block_3d.1} parent=5 // pred_region
      // Predicated region
      $region25: #{se_block_3d.1} parent=23 // pred_check
        %p128 = pneg %p29
      $region26: #{se_block_3d.1} parent=23 // pred_check_branch
        %130 = sbr.rel (%p128) target = $region28
      $region27: #{se_block_3d.1} parent=23 // pred_region
        %p131 = scmp.lt.s32.totalorder %s9, 1
        %s132 = scalar_select %p131, %s9, 1
        %s133 = smul.addr %s132, 128
        %s134 = smul.addr %s133, 8
        %s135 = scalar_lea.vmem %s0, %s134
      $region28: #{se_block_3d.1} parent=23 // pred_fallthru
        _
    $region24: #{se_block_3d.1} parent=5 // pred_fallthru
      _
    %p136 = scmp.le.s32.totalorder 1, %s9
    %p137 = scmp.lt.s32.totalorder %s9, 3
    %p138 = pnand %p136, %p137
    %p139 = pneg %p138
    // Predicated region
    $region29: #{se_block_3d.1} parent=5 // pred_check
      _
    $region30: #{se_block_3d.1} parent=5 // pred_check_branch
      %141 = sbr.rel (%p138) target = $region32
    $region31: #{se_block_3d.1} parent=5 // pred_region
      %s142 = ssub.s32 %s9, 1
      %p143 = scmp.lt.s32.totalorder %s14, 1
      %s144 = scalar_select %p143, %s14, 1
      %s145 = smul.addr %s144, 128
      %s146 = smul.addr %s145, 8
      %s147 = scalar_lea.vmem %s0, %s146
      %p148 = pneg %p35
      %p149 = pneg %p32
      %p150 = pneg %p56
      %p151 = pneg %p53
      %p152 = pneg %p77
      %p153 = pneg %p74
      %p154 = pneg %p103
      %p155 = pneg %p100
      %p156 = scmp.lt.s32.totalorder %s14, 1
      %s157 = scalar_select %p156, %s14, 1
      %s158 = smul.addr %s157, 128
      %s159 = smul.addr %s158, 8
      %s160 = scalar_lea.vmem %s3, %s159
      %p161 = scmp.lt.s32.totalorder %s14, 1
      %s162 = scalar_select %p161, %s14, 1
      %s163 = smul.addr %s162, 128
      %s164 = smul.addr %s163, 8
      %s165 = scalar_lea.vmem %s0, %s164
      %p166 = scmp.lt.s32.totalorder %s14, 1
      %s167 = scalar_select %p166, %s14, 1
      %s168 = smul.addr %s167, 128
      %s169 = smul.addr %s168, 8
      %s170 = scalar_lea.vmem %s3, %s169
      %v171 = vld [vmem:[%s165] sm:$0xff]
      %v172 = vld [vmem:[%s165 + $0x8] sm:$0xff]
      %v173 = vld [vmem:[%s165 + $0x10] sm:$0xff]
      %v174 = vld [vmem:[%s165 + $0x18] sm:$0xff]
      %v175 = vld [vmem:[%s165 + $0x20] sm:$0xff]
      %v176 = vld [vmem:[%s165 + $0x28] sm:$0xff]
      %v177 = vld [vmem:[%s165 + $0x30] sm:$0xff]
      %v178 = vld [vmem:[%s165 + $0x38] sm:$0xff]
      %v179 = vld [vmem:[%s165 + $0x40] sm:$0xff]
      %v180 = vld [vmem:[%s165 + $0x48] sm:$0xff]
      %v181 = vld [vmem:[%s165 + $0x50] sm:$0xff]
      %v182 = vld [vmem:[%s165 + $0x58] sm:$0xff]
      %v183 = vld [vmem:[%s165 + $0x60] sm:$0xff]
      %v184 = vld [vmem:[%s165 + $0x68] sm:$0xff]
      %v185 = vld [vmem:[%s165 + $0x70] sm:$0xff]
      %v186 = vld [vmem:[%s165 + $0x78] sm:$0xff]
      %v187 = vld [vmem:[%s165 + $0x80] sm:$0xff]
      %v188 = vld [vmem:[%s165 + $0x88] sm:$0xff]
      %v189 = vld [vmem:[%s165 + $0x90] sm:$0xff]
      %v190 = vld [vmem:[%s165 + $0x98] sm:$0xff]
      %v191 = vld [vmem:[%s165 + $0xa0] sm:$0xff]
      %v192 = vld [vmem:[%s165 + $0xa8] sm:$0xff]
      %v193 = vld [vmem:[%s165 + $0xb0] sm:$0xff]
      %v194 = vld [vmem:[%s165 + $0xb8] sm:$0xff]
      %v195 = vld [vmem:[%s165 + $0xc0] sm:$0xff]
      %v196 = vld [vmem:[%s165 + $0xc8] sm:$0xff]
      %v197 = vld [vmem:[%s165 + $0xd0] sm:$0xff]
      %v198 = vld [vmem:[%s165 + $0xd8] sm:$0xff]
      %v199 = vld [vmem:[%s165 + $0xe0] sm:$0xff]
      %v200 = vld [vmem:[%s165 + $0xe8] sm:$0xff]
      %v201 = vld [vmem:[%s165 + $0xf0] sm:$0xff]
      %v202 = vld [vmem:[%s165 + $0xf8] sm:$0xff]
      %v203 = vld [vmem:[%s165 + $0x100] sm:$0xff]
      %v204 = vld [vmem:[%s165 + $0x108] sm:$0xff]
      %v205 = vld [vmem:[%s165 + $0x110] sm:$0xff]
      %v206 = vld [vmem:[%s165 + $0x118] sm:$0xff]
      %v207 = vld [vmem:[%s165 + $0x120] sm:$0xff]
      %v208 = vld [vmem:[%s165 + $0x128] sm:$0xff]
      %v209 = vld [vmem:[%s165 + $0x130] sm:$0xff]
      %v210 = vld [vmem:[%s165 + $0x138] sm:$0xff]
      %v211 = vld [vmem:[%s165 + $0x140] sm:$0xff]
      %v212 = vld [vmem:[%s165 + $0x148] sm:$0xff]
      %v213 = vld [vmem:[%s165 + $0x150] sm:$0xff]
      %v214 = vld [vmem:[%s165 + $0x158] sm:$0xff]
      %v215 = vld [vmem:[%s165 + $0x160] sm:$0xff]
      %v216 = vld [vmem:[%s165 + $0x168] sm:$0xff]
      %v217 = vld [vmem:[%s165 + $0x170] sm:$0xff]
      %v218 = vld [vmem:[%s165 + $0x178] sm:$0xff]
      %v219 = vld [vmem:[%s165 + $0x180] sm:$0xff]
      %v220 = vld [vmem:[%s165 + $0x188] sm:$0xff]
      %v221 = vld [vmem:[%s165 + $0x190] sm:$0xff]
      %v222 = vld [vmem:[%s165 + $0x198] sm:$0xff]
      %v223 = vld [vmem:[%s165 + $0x1a0] sm:$0xff]
      %v224 = vld [vmem:[%s165 + $0x1a8] sm:$0xff]
      %v225 = vld [vmem:[%s165 + $0x1b0] sm:$0xff]
      %v226 = vld [vmem:[%s165 + $0x1b8] sm:$0xff]
      %v227 = vld [vmem:[%s165 + $0x1c0] sm:$0xff]
      %v228 = vld [vmem:[%s165 + $0x1c8] sm:$0xff]
      %v229 = vld [vmem:[%s165 + $0x1d0] sm:$0xff]
      %v230 = vld [vmem:[%s165 + $0x1d8] sm:$0xff]
      %v231 = vld [vmem:[%s165 + $0x1e0] sm:$0xff]
      %v232 = vld [vmem:[%s165 + $0x1e8] sm:$0xff]
      %v233 = vld [vmem:[%s165 + $0x1f0] sm:$0xff]
      %v234 = vld [vmem:[%s165 + $0x1f8] sm:$0xff]
      %v235 = vld [vmem:[%s165 + $0x200] sm:$0xff]
      %v236 = vld [vmem:[%s165 + $0x208] sm:$0xff]
      %v237 = vld [vmem:[%s165 + $0x210] sm:$0xff]
      %v238 = vld [vmem:[%s165 + $0x218] sm:$0xff]
      %v239 = vld [vmem:[%s165 + $0x220] sm:$0xff]
      %v240 = vld [vmem:[%s165 + $0x228] sm:$0xff]
      %v241 = vld [vmem:[%s165 + $0x230] sm:$0xff]
      %v242 = vld [vmem:[%s165 + $0x238] sm:$0xff]
      %v243 = vld [vmem:[%s165 + $0x240] sm:$0xff]
      %v244 = vld [vmem:[%s165 + $0x248] sm:$0xff]
      %v245 = vld [vmem:[%s165 + $0x250] sm:$0xff]
      %v246 = vld [vmem:[%s165 + $0x258] sm:$0xff]
      %v247 = vld [vmem:[%s165 + $0x260] sm:$0xff]
      %v248 = vld [vmem:[%s165 + $0x268] sm:$0xff]
      %v249 = vld [vmem:[%s165 + $0x270] sm:$0xff]
      %v250 = vld [vmem:[%s165 + $0x278] sm:$0xff]
      %v251 = vld [vmem:[%s165 + $0x280] sm:$0xff]
      %v252 = vld [vmem:[%s165 + $0x288] sm:$0xff]
      %v253 = vld [vmem:[%s165 + $0x290] sm:$0xff]
      %v254 = vld [vmem:[%s165 + $0x298] sm:$0xff]
      %v255 = vld [vmem:[%s165 + $0x2a0] sm:$0xff]
      %v256 = vld [vmem:[%s165 + $0x2a8] sm:$0xff]
      %v257 = vld [vmem:[%s165 + $0x2b0] sm:$0xff]
      %v258 = vld [vmem:[%s165 + $0x2b8] sm:$0xff]
      %v259 = vld [vmem:[%s165 + $0x2c0] sm:$0xff]
      %v260 = vld [vmem:[%s165 + $0x2c8] sm:$0xff]
      %v261 = vld [vmem:[%s165 + $0x2d0] sm:$0xff]
      %v262 = vld [vmem:[%s165 + $0x2d8] sm:$0xff]
      %v263 = vld [vmem:[%s165 + $0x2e0] sm:$0xff]
      %v264 = vld [vmem:[%s165 + $0x2e8] sm:$0xff]
      %v265 = vld [vmem:[%s165 + $0x2f0] sm:$0xff]
      %v266 = vld [vmem:[%s165 + $0x2f8] sm:$0xff]
      %v267 = vld [vmem:[%s165 + $0x300] sm:$0xff]
      %v268 = vld [vmem:[%s165 + $0x308] sm:$0xff]
      %v269 = vld [vmem:[%s165 + $0x310] sm:$0xff]
      %v270 = vld [vmem:[%s165 + $0x318] sm:$0xff]
      %v271 = vld [vmem:[%s165 + $0x320] sm:$0xff]
      %v272 = vld [vmem:[%s165 + $0x328] sm:$0xff]
      %v273 = vld [vmem:[%s165 + $0x330] sm:$0xff]
      %v274 = vld [vmem:[%s165 + $0x338] sm:$0xff]
      %v275 = vld [vmem:[%s165 + $0x340] sm:$0xff]
      %v276 = vld [vmem:[%s165 + $0x348] sm:$0xff]
      %v277 = vld [vmem:[%s165 + $0x350] sm:$0xff]
      %v278 = vld [vmem:[%s165 + $0x358] sm:$0xff]
      %v279 = vld [vmem:[%s165 + $0x360] sm:$0xff]
      %v280 = vld [vmem:[%s165 + $0x368] sm:$0xff]
      %v281 = vld [vmem:[%s165 + $0x370] sm:$0xff]
      %v282 = vld [vmem:[%s165 + $0x378] sm:$0xff]
      %v283 = vld [vmem:[%s165 + $0x380] sm:$0xff]
      %v284 = vld [vmem:[%s165 + $0x388] sm:$0xff]
      %v285 = vld [vmem:[%s165 + $0x390] sm:$0xff]
      %v286 = vld [vmem:[%s165 + $0x398] sm:$0xff]
      %v287 = vld [vmem:[%s165 + $0x3a0] sm:$0xff]
      %v288 = vld [vmem:[%s165 + $0x3a8] sm:$0xff]
      %v289 = vld [vmem:[%s165 + $0x3b0] sm:$0xff]
      %v290 = vld [vmem:[%s165 + $0x3b8] sm:$0xff]
      %v291 = vld [vmem:[%s165 + $0x3c0] sm:$0xff]
      %v292 = vld [vmem:[%s165 + $0x3c8] sm:$0xff]
      %v293 = vld [vmem:[%s165 + $0x3d0] sm:$0xff]
      %v294 = vld [vmem:[%s165 + $0x3d8] sm:$0xff]
      %v295 = vld [vmem:[%s165 + $0x3e0] sm:$0xff]
      %v296 = vld [vmem:[%s165 + $0x3e8] sm:$0xff]
      %v297 = vld [vmem:[%s165 + $0x3f0] sm:$0xff]
      %v298 = vld [vmem:[%s165 + $0x3f8] sm:$0xff]
      %v299 = vadd.f32 %v171, %v172
      %v300 = vadd.f32 %v299, %v173
      %v301 = vadd.f32 %v300, %v174
      %v302 = vadd.f32 %v301, %v175
      %v303 = vadd.f32 %v302, %v176
      %v304 = vadd.f32 %v303, %v177
      %v305 = vadd.f32 %v304, %v178
      %v306 = vadd.f32 %v305, %v179
      %v307 = vadd.f32 %v306, %v180
      %v308 = vadd.f32 %v307, %v181
      %v309 = vadd.f32 %v308, %v182
      %v310 = vadd.f32 %v309, %v183
      %v311 = vadd.f32 %v310, %v184
      %v312 = vadd.f32 %v311, %v185
      %v313 = vadd.f32 %v312, %v186
      %v314 = vadd.f32 %v313, %v187
      %v315 = vadd.f32 %v314, %v188
      %v316 = vadd.f32 %v315, %v189
      %v317 = vadd.f32 %v316, %v190
      %v318 = vadd.f32 %v317, %v191
      %v319 = vadd.f32 %v318, %v192
      %v320 = vadd.f32 %v319, %v193
      %v321 = vadd.f32 %v320, %v194
      %v322 = vadd.f32 %v321, %v195
      %v323 = vadd.f32 %v322, %v196
      %v324 = vadd.f32 %v323, %v197
      %v325 = vadd.f32 %v324, %v198
      %v326 = vadd.f32 %v325, %v199
      %v327 = vadd.f32 %v326, %v200
      %v328 = vadd.f32 %v327, %v201
      %v329 = vadd.f32 %v328, %v202
      %330 = vadd.xlane.f32.xlu0 %v329
      %v331 = vpop.xlane.xlu0 %330
      %v332 = vadd.f32 %v203, %v204
      %v333 = vadd.f32 %v332, %v205
      %v334 = vadd.f32 %v333, %v206
      %v335 = vadd.f32 %v334, %v207
      %v336 = vadd.f32 %v335, %v208
      %v337 = vadd.f32 %v336, %v209
      %v338 = vadd.f32 %v337, %v210
      %v339 = vadd.f32 %v338, %v211
      %v340 = vadd.f32 %v339, %v212
      %v341 = vadd.f32 %v340, %v213
      %v342 = vadd.f32 %v341, %v214
      %v343 = vadd.f32 %v342, %v215
      %v344 = vadd.f32 %v343, %v216
      %v345 = vadd.f32 %v344, %v217
      %v346 = vadd.f32 %v345, %v218
      %v347 = vadd.f32 %v346, %v219
      %v348 = vadd.f32 %v347, %v220
      %v349 = vadd.f32 %v348, %v221
      %v350 = vadd.f32 %v349, %v222
      %v351 = vadd.f32 %v350, %v223
      %v352 = vadd.f32 %v351, %v224
      %v353 = vadd.f32 %v352, %v225
      %v354 = vadd.f32 %v353, %v226
      %v355 = vadd.f32 %v354, %v227
      %v356 = vadd.f32 %v355, %v228
      %v357 = vadd.f32 %v356, %v229
      %v358 = vadd.f32 %v357, %v230
      %v359 = vadd.f32 %v358, %v231
      %v360 = vadd.f32 %v359, %v232
      %v361 = vadd.f32 %v360, %v233
      %v362 = vadd.f32 %v361, %v234
      %363 = vadd.xlane.f32.xlu0 %v362
      %v364 = vpop.xlane.xlu0 %363
      %v365 = vadd.f32 %v235, %v236
      %v366 = vadd.f32 %v365, %v237
      %v367 = vadd.f32 %v366, %v238
      %v368 = vadd.f32 %v367, %v239
      %v369 = vadd.f32 %v368, %v240
      %v370 = vadd.f32 %v369, %v241
      %v371 = vadd.f32 %v370, %v242
      %v372 = vadd.f32 %v371, %v243
      %v373 = vadd.f32 %v372, %v244
      %v374 = vadd.f32 %v373, %v245
      %v375 = vadd.f32 %v374, %v246
      %v376 = vadd.f32 %v375, %v247
      %v377 = vadd.f32 %v376, %v248
      %v378 = vadd.f32 %v377, %v249
      %v379 = vadd.f32 %v378, %v250
      %v380 = vadd.f32 %v379, %v251
      %v381 = vadd.f32 %v380, %v252
      %v382 = vadd.f32 %v381, %v253
      %v383 = vadd.f32 %v382, %v254
      %v384 = vadd.f32 %v383, %v255
      %v385 = vadd.f32 %v384, %v256
      %v386 = vadd.f32 %v385, %v257
      %v387 = vadd.f32 %v386, %v258
      %v388 = vadd.f32 %v387, %v259
      %v389 = vadd.f32 %v388, %v260
      %v390 = vadd.f32 %v389, %v261
      %v391 = vadd.f32 %v390, %v262
      %v392 = vadd.f32 %v391, %v263
      %v393 = vadd.f32 %v392, %v264
      %v394 = vadd.f32 %v393, %v265
      %v395 = vadd.f32 %v394, %v266
      %396 = vadd.xlane.f32.xlu0 %v395
      %v397 = vpop.xlane.xlu0 %396
      %v398 = vadd.f32 %v267, %v268
      %v399 = vadd.f32 %v398, %v269
      %v400 = vadd.f32 %v399, %v270
      %v401 = vadd.f32 %v400, %v271
      %v402 = vadd.f32 %v401, %v272
      %v403 = vadd.f32 %v402, %v273
      %v404 = vadd.f32 %v403, %v274
      %v405 = vadd.f32 %v404, %v275
      %v406 = vadd.f32 %v405, %v276
      %v407 = vadd.f32 %v406, %v277
      %v408 = vadd.f32 %v407, %v278
      %v409 = vadd.f32 %v408, %v279
      %v410 = vadd.f32 %v409, %v280
      %v411 = vadd.f32 %v410, %v281
      %v412 = vadd.f32 %v411, %v282
      %v413 = vadd.f32 %v412, %v283
      %v414 = vadd.f32 %v413, %v284
      %v415 = vadd.f32 %v414, %v285
      %v416 = vadd.f32 %v415, %v286
      %v417 = vadd.f32 %v416, %v287
      %v418 = vadd.f32 %v417, %v288
      %v419 = vadd.f32 %v418, %v289
      %v420 = vadd.f32 %v419, %v290
      %v421 = vadd.f32 %v420, %v291
      %v422 = vadd.f32 %v421, %v292
      %v423 = vadd.f32 %v422, %v293
      %v424 = vadd.f32 %v423, %v294
      %v425 = vadd.f32 %v424, %v295
      %v426 = vadd.f32 %v425, %v296
      %v427 = vadd.f32 %v426, %v297
      %v428 = vadd.f32 %v427, %v298
      %429 = vadd.xlane.f32.xlu0 %v428
      %v430 = vpop.xlane.xlu0 %429
      %v431 = vmul.f32 %v331, 0.00024414063
      %v432 = vmul.f32 %v364, 0.00024414063
      %v433 = vmul.f32 %v397, 0.00024414063
      %v434 = vmul.f32 %v430, 0.00024414063
      %v435 = vld [vmem:[%s1] sm:$0xff]
      %v436 = vld [vmem:[%s1 + $0x8] sm:$0xff]
      %v437 = vld [vmem:[%s1 + $0x10] sm:$0xff]
      %v438 = vld [vmem:[%s1 + $0x18] sm:$0xff]
      %v439 = vld [vmem:[%s2] sm:$0xff]
      %v440 = vld [vmem:[%s2 + $0x8] sm:$0xff]
      %v441 = vld [vmem:[%s2 + $0x10] sm:$0xff]
      %v442 = vld [vmem:[%s2 + $0x18] sm:$0xff]
      %v443 = vmul.f32 %v431, %v435
      %v444 = vmul.f32 %v432, %v436
      %v445 = vmul.f32 %v433, %v437
      %v446 = vmul.f32 %v434, %v438
      %vm447 = vcmask 15360
      %v448 = vsel %vm447, %v443, 0.0
      %v449 = vsel %vm447, %v444, 0.0
      %v450 = vadd.f32 %v448, %v449
      %v451 = vsel %vm447, %v445, 0.0
      %v452 = vadd.f32 %v450, %v451
      %v453 = vsel %vm447, %v446, 0.0
      %v454 = vadd.f32 %v452, %v453
      %v455 = vrot.slane %v454, 4
      %v456 = vadd.f32 %v454, %v455
      %v457 = vrot.slane %v456, 2
      %v458 = vadd.f32 %v456, %v457
      %v459 = vrot.slane %v458, 1
      %v460 = vadd.f32 %v458, %v459
      %v461 = vmax.f32 %v460, 0.0
      %v462 = vmul.f32 %v439, %v461
      %v463 = vmul.f32 %v440, %v461
      %v464 = vmul.f32 %v441, %v461
      %v465 = vmul.f32 %v442, %v461
      %v466 = vsel %vm447, %v462, 0.0
      %467 = vadd.xlane.f32.xlu0 %v466
      %v468 = vpop.xlane.xlu0 %467
      %v469 = vsel %vm447, %v463, 0.0
      %470 = vadd.xlane.f32.xlu0 %v469
      %v471 = vpop.xlane.xlu0 %470
      %v472 = vsel %vm447, %v464, 0.0
      %473 = vadd.xlane.f32.xlu0 %v472
      %v474 = vpop.xlane.xlu0 %473
      %v475 = vsel %vm447, %v465, 0.0
      %476 = vadd.xlane.f32.xlu0 %v475
      %v477 = vpop.xlane.xlu0 %476
      %v478 = vxor.u32 %v468, 2147483648
      %v479 = vxor.u32 %v471, 2147483648
      %v480 = vxor.u32 %v474, 2147483648
      %v481 = vxor.u32 %v477, 2147483648
      %v482 = vmul.f32 %v478, 1.442695
      %v483 = vpow.pop %v482
      %v484 = vmul.f32 %v479, 1.442695
      %v485 = vpow.pop %v484
      %v486 = vmul.f32 %v480, 1.442695
      %v487 = vpow.pop %v486
      %v488 = vmul.f32 %v481, 1.442695
      %v489 = vpow.pop %v488
      %v490 = vadd.f32 %v483, 1.0
      %v491 = vadd.f32 %v485, 1.0
      %v492 = vadd.f32 %v487, 1.0
      %v493 = vadd.f32 %v489, 1.0
      %v494 = vrcp.pop %v490
      %v495 = vmul.f32 1.0, %v494
      %v496 = vrcp.pop %v491
      %v497 = vmul.f32 1.0, %v496
      %v498 = vrcp.pop %v492
      %v499 = vmul.f32 1.0, %v498
      %v500 = vrcp.pop %v493
      %v501 = vmul.f32 1.0, %v500
      %v502 = vmul.f32 %v171, %v495
      %v503 = vmul.f32 %v172, %v495
      %v504 = vmul.f32 %v173, %v495
      %v505 = vmul.f32 %v174, %v495
      %v506 = vmul.f32 %v175, %v495
      %v507 = vmul.f32 %v176, %v495
      %v508 = vmul.f32 %v177, %v495
      %v509 = vmul.f32 %v178, %v495
      %v510 = vmul.f32 %v179, %v495
      %v511 = vmul.f32 %v180, %v495
      %v512 = vmul.f32 %v181, %v495
      %v513 = vmul.f32 %v182, %v495
      %v514 = vmul.f32 %v183, %v495
      %v515 = vmul.f32 %v184, %v495
      %v516 = vmul.f32 %v185, %v495
      %v517 = vmul.f32 %v186, %v495
      %v518 = vmul.f32 %v187, %v495
      %v519 = vmul.f32 %v188, %v495
      %v520 = vmul.f32 %v189, %v495
      %v521 = vmul.f32 %v190, %v495
      %v522 = vmul.f32 %v191, %v495
      %v523 = vmul.f32 %v192, %v495
      %v524 = vmul.f32 %v193, %v495
      %v525 = vmul.f32 %v194, %v495
      %v526 = vmul.f32 %v195, %v495
      %v527 = vmul.f32 %v196, %v495
      %v528 = vmul.f32 %v197, %v495
      %v529 = vmul.f32 %v198, %v495
      %v530 = vmul.f32 %v199, %v495
      %v531 = vmul.f32 %v200, %v495
      %v532 = vmul.f32 %v201, %v495
      %v533 = vmul.f32 %v202, %v495
      %v534 = vmul.f32 %v203, %v497
      %v535 = vmul.f32 %v204, %v497
      %v536 = vmul.f32 %v205, %v497
      %v537 = vmul.f32 %v206, %v497
      %v538 = vmul.f32 %v207, %v497
      %v539 = vmul.f32 %v208, %v497
      %v540 = vmul.f32 %v209, %v497
      %v541 = vmul.f32 %v210, %v497
      %v542 = vmul.f32 %v211, %v497
      %v543 = vmul.f32 %v212, %v497
      %v544 = vmul.f32 %v213, %v497
      %v545 = vmul.f32 %v214, %v497
      %v546 = vmul.f32 %v215, %v497
      %v547 = vmul.f32 %v216, %v497
      %v548 = vmul.f32 %v217, %v497
      %v549 = vmul.f32 %v218, %v497
      %v550 = vmul.f32 %v219, %v497
      %v551 = vmul.f32 %v220, %v497
      %v552 = vmul.f32 %v221, %v497
      %v553 = vmul.f32 %v222, %v497
      %v554 = vmul.f32 %v223, %v497
      %v555 = vmul.f32 %v224, %v497
      %v556 = vmul.f32 %v225, %v497
      %v557 = vmul.f32 %v226, %v497
      %v558 = vmul.f32 %v227, %v497
      %v559 = vmul.f32 %v228, %v497
      %v560 = vmul.f32 %v229, %v497
      %v561 = vmul.f32 %v230, %v497
      %v562 = vmul.f32 %v231, %v497
      %v563 = vmul.f32 %v232, %v497
      %v564 = vmul.f32 %v233, %v497
      %v565 = vmul.f32 %v234, %v497
      %v566 = vmul.f32 %v235, %v499
      %v567 = vmul.f32 %v236, %v499
      %v568 = vmul.f32 %v237, %v499
      %v569 = vmul.f32 %v238, %v499
      %v570 = vmul.f32 %v239, %v499
      %v571 = vmul.f32 %v240, %v499
      %v572 = vmul.f32 %v241, %v499
      %v573 = vmul.f32 %v242, %v499
      %v574 = vmul.f32 %v243, %v499
      %v575 = vmul.f32 %v244, %v499
      %v576 = vmul.f32 %v245, %v499
      %v577 = vmul.f32 %v246, %v499
      %v578 = vmul.f32 %v247, %v499
      %v579 = vmul.f32 %v248, %v499
      %v580 = vmul.f32 %v249, %v499
      %v581 = vmul.f32 %v250, %v499
      %v582 = vmul.f32 %v251, %v499
      %v583 = vmul.f32 %v252, %v499
      %v584 = vmul.f32 %v253, %v499
      %v585 = vmul.f32 %v254, %v499
      %v586 = vmul.f32 %v255, %v499
      %v587 = vmul.f32 %v256, %v499
      %v588 = vmul.f32 %v257, %v499
      %v589 = vmul.f32 %v258, %v499
      %v590 = vmul.f32 %v259, %v499
      %v591 = vmul.f32 %v260, %v499
      %v592 = vmul.f32 %v261, %v499
      %v593 = vmul.f32 %v262, %v499
      %v594 = vmul.f32 %v263, %v499
      %v595 = vmul.f32 %v264, %v499
      %v596 = vmul.f32 %v265, %v499
      %v597 = vmul.f32 %v266, %v499
      %v598 = vmul.f32 %v267, %v501
      %v599 = vmul.f32 %v268, %v501
      %v600 = vmul.f32 %v269, %v501
      %v601 = vmul.f32 %v270, %v501
      %v602 = vmul.f32 %v271, %v501
      %v603 = vmul.f32 %v272, %v501
      %v604 = vmul.f32 %v273, %v501
      %v605 = vmul.f32 %v274, %v501
      %v606 = vmul.f32 %v275, %v501
      %v607 = vmul.f32 %v276, %v501
      %v608 = vmul.f32 %v277, %v501
      %v609 = vmul.f32 %v278, %v501
      %v610 = vmul.f32 %v279, %v501
      %v611 = vmul.f32 %v280, %v501
      %v612 = vmul.f32 %v281, %v501
      %v613 = vmul.f32 %v282, %v501
      %v614 = vmul.f32 %v283, %v501
      %v615 = vmul.f32 %v284, %v501
      %v616 = vmul.f32 %v285, %v501
      %v617 = vmul.f32 %v286, %v501
      %v618 = vmul.f32 %v287, %v501
      %v619 = vmul.f32 %v288, %v501
      %v620 = vmul.f32 %v289, %v501
      %v621 = vmul.f32 %v290, %v501
      %v622 = vmul.f32 %v291, %v501
      %v623 = vmul.f32 %v292, %v501
      %v624 = vmul.f32 %v293, %v501
      %v625 = vmul.f32 %v294, %v501
      %v626 = vmul.f32 %v295, %v501
      %v627 = vmul.f32 %v296, %v501
      %v628 = vmul.f32 %v297, %v501
      %v629 = vmul.f32 %v298, %v501
      %630 = vst [vmem:[%s170] sm:$0xff] %v502
      %631 = vst [vmem:[%s170 + $0x8] sm:$0xff] %v503
      %632 = vst [vmem:[%s170 + $0x10] sm:$0xff] %v504
      %633 = vst [vmem:[%s170 + $0x18] sm:$0xff] %v505
      %634 = vst [vmem:[%s170 + $0x20] sm:$0xff] %v506
      %635 = vst [vmem:[%s170 + $0x28] sm:$0xff] %v507
      %636 = vst [vmem:[%s170 + $0x30] sm:$0xff] %v508
      %637 = vst [vmem:[%s170 + $0x38] sm:$0xff] %v509
      %638 = vst [vmem:[%s170 + $0x40] sm:$0xff] %v510
      %639 = vst [vmem:[%s170 + $0x48] sm:$0xff] %v511
      %640 = vst [vmem:[%s170 + $0x50] sm:$0xff] %v512
      %641 = vst [vmem:[%s170 + $0x58] sm:$0xff] %v513
      %642 = vst [vmem:[%s170 + $0x60] sm:$0xff] %v514
      %643 = vst [vmem:[%s170 + $0x68] sm:$0xff] %v515
      %644 = vst [vmem:[%s170 + $0x70] sm:$0xff] %v516
      %645 = vst [vmem:[%s170 + $0x78] sm:$0xff] %v517
      %646 = vst [vmem:[%s170 + $0x80] sm:$0xff] %v518
      %647 = vst [vmem:[%s170 + $0x88] sm:$0xff] %v519
      %648 = vst [vmem:[%s170 + $0x90] sm:$0xff] %v520
      %649 = vst [vmem:[%s170 + $0x98] sm:$0xff] %v521
      %650 = vst [vmem:[%s170 + $0xa0] sm:$0xff] %v522
      %651 = vst [vmem:[%s170 + $0xa8] sm:$0xff] %v523
      %652 = vst [vmem:[%s170 + $0xb0] sm:$0xff] %v524
      %653 = vst [vmem:[%s170 + $0xb8] sm:$0xff] %v525
      %654 = vst [vmem:[%s170 + $0xc0] sm:$0xff] %v526
      %655 = vst [vmem:[%s170 + $0xc8] sm:$0xff] %v527
      %656 = vst [vmem:[%s170 + $0xd0] sm:$0xff] %v528
      %657 = vst [vmem:[%s170 + $0xd8] sm:$0xff] %v529
      %658 = vst [vmem:[%s170 + $0xe0] sm:$0xff] %v530
      %659 = vst [vmem:[%s170 + $0xe8] sm:$0xff] %v531
      %660 = vst [vmem:[%s170 + $0xf0] sm:$0xff] %v532
      %661 = vst [vmem:[%s170 + $0xf8] sm:$0xff] %v533
      %662 = vst [vmem:[%s170 + $0x100] sm:$0xff] %v534
      %663 = vst [vmem:[%s170 + $0x108] sm:$0xff] %v535
      %664 = vst [vmem:[%s170 + $0x110] sm:$0xff] %v536
      %665 = vst [vmem:[%s170 + $0x118] sm:$0xff] %v537
      %666 = vst [vmem:[%s170 + $0x120] sm:$0xff] %v538
      %667 = vst [vmem:[%s170 + $0x128] sm:$0xff] %v539
      %668 = vst [vmem:[%s170 + $0x130] sm:$0xff] %v540
      %669 = vst [vmem:[%s170 + $0x138] sm:$0xff] %v541
      %670 = vst [vmem:[%s170 + $0x140] sm:$0xff] %v542
      %671 = vst [vmem:[%s170 + $0x148] sm:$0xff] %v543
      %672 = vst [vmem:[%s170 + $0x150] sm:$0xff] %v544
      %673 = vst [vmem:[%s170 + $0x158] sm:$0xff] %v545
      %674 = vst [vmem:[%s170 + $0x160] sm:$0xff] %v546
      %675 = vst [vmem:[%s170 + $0x168] sm:$0xff] %v547
      %676 = vst [vmem:[%s170 + $0x170] sm:$0xff] %v548
      %677 = vst [vmem:[%s170 + $0x178] sm:$0xff] %v549
      %678 = vst [vmem:[%s170 + $0x180] sm:$0xff] %v550
      %679 = vst [vmem:[%s170 + $0x188] sm:$0xff] %v551
      %680 = vst [vmem:[%s170 + $0x190] sm:$0xff] %v552
      %681 = vst [vmem:[%s170 + $0x198] sm:$0xff] %v553
      %682 = vst [vmem:[%s170 + $0x1a0] sm:$0xff] %v554
      %683 = vst [vmem:[%s170 + $0x1a8] sm:$0xff] %v555
      %684 = vst [vmem:[%s170 + $0x1b0] sm:$0xff] %v556
      %685 = vst [vmem:[%s170 + $0x1b8] sm:$0xff] %v557
      %686 = vst [vmem:[%s170 + $0x1c0] sm:$0xff] %v558
      %687 = vst [vmem:[%s170 + $0x1c8] sm:$0xff] %v559
      %688 = vst [vmem:[%s170 + $0x1d0] sm:$0xff] %v560
      %689 = vst [vmem:[%s170 + $0x1d8] sm:$0xff] %v561
      %690 = vst [vmem:[%s170 + $0x1e0] sm:$0xff] %v562
      %691 = vst [vmem:[%s170 + $0x1e8] sm:$0xff] %v563
      %692 = vst [vmem:[%s170 + $0x1f0] sm:$0xff] %v564
      %693 = vst [vmem:[%s170 + $0x1f8] sm:$0xff] %v565
      %694 = vst [vmem:[%s170 + $0x200] sm:$0xff] %v566
      %695 = vst [vmem:[%s170 + $0x208] sm:$0xff] %v567
      %696 = vst [vmem:[%s170 + $0x210] sm:$0xff] %v568
      %697 = vst [vmem:[%s170 + $0x218] sm:$0xff] %v569
      %698 = vst [vmem:[%s170 + $0x220] sm:$0xff] %v570
      %699 = vst [vmem:[%s170 + $0x228] sm:$0xff] %v571
      %700 = vst [vmem:[%s170 + $0x230] sm:$0xff] %v572
      %701 = vst [vmem:[%s170 + $0x238] sm:$0xff] %v573
      %702 = vst [vmem:[%s170 + $0x240] sm:$0xff] %v574
      %703 = vst [vmem:[%s170 + $0x248] sm:$0xff] %v575
      %704 = vst [vmem:[%s170 + $0x250] sm:$0xff] %v576
      %705 = vst [vmem:[%s170 + $0x258] sm:$0xff] %v577
      %706 = vst [vmem:[%s170 + $0x260] sm:$0xff] %v578
      %707 = vst [vmem:[%s170 + $0x268] sm:$0xff] %v579
      %708 = vst [vmem:[%s170 + $0x270] sm:$0xff] %v580
      %709 = vst [vmem:[%s170 + $0x278] sm:$0xff] %v581
      %710 = vst [vmem:[%s170 + $0x280] sm:$0xff] %v582
      %711 = vst [vmem:[%s170 + $0x288] sm:$0xff] %v583
      %712 = vst [vmem:[%s170 + $0x290] sm:$0xff] %v584
      %713 = vst [vmem:[%s170 + $0x298] sm:$0xff] %v585
      %714 = vst [vmem:[%s170 + $0x2a0] sm:$0xff] %v586
      %715 = vst [vmem:[%s170 + $0x2a8] sm:$0xff] %v587
      %716 = vst [vmem:[%s170 + $0x2b0] sm:$0xff] %v588
      %717 = vst [vmem:[%s170 + $0x2b8] sm:$0xff] %v589
      %718 = vst [vmem:[%s170 + $0x2c0] sm:$0xff] %v590
      %719 = vst [vmem:[%s170 + $0x2c8] sm:$0xff] %v591
      %720 = vst [vmem:[%s170 + $0x2d0] sm:$0xff] %v592
      %721 = vst [vmem:[%s170 + $0x2d8] sm:$0xff] %v593
      %722 = vst [vmem:[%s170 + $0x2e0] sm:$0xff] %v594
      %723 = vst [vmem:[%s170 + $0x2e8] sm:$0xff] %v595
      %724 = vst [vmem:[%s170 + $0x2f0] sm:$0xff] %v596
      %725 = vst [vmem:[%s170 + $0x2f8] sm:$0xff] %v597
      %726 = vst [vmem:[%s170 + $0x300] sm:$0xff] %v598
      %727 = vst [vmem:[%s170 + $0x308] sm:$0xff] %v599
      %728 = vst [vmem:[%s170 + $0x310] sm:$0xff] %v600
      %729 = vst [vmem:[%s170 + $0x318] sm:$0xff] %v601
      %730 = vst [vmem:[%s170 + $0x320] sm:$0xff] %v602
      %731 = vst [vmem:[%s170 + $0x328] sm:$0xff] %v603
      %732 = vst [vmem:[%s170 + $0x330] sm:$0xff] %v604
      %733 = vst [vmem:[%s170 + $0x338] sm:$0xff] %v605
      %734 = vst [vmem:[%s170 + $0x340] sm:$0xff] %v606
      %735 = vst [vmem:[%s170 + $0x348] sm:$0xff] %v607
      %736 = vst [vmem:[%s170 + $0x350] sm:$0xff] %v608
      %737 = vst [vmem:[%s170 + $0x358] sm:$0xff] %v609
      %738 = vst [vmem:[%s170 + $0x360] sm:$0xff] %v610
      %739 = vst [vmem:[%s170 + $0x368] sm:$0xff] %v611
      %740 = vst [vmem:[%s170 + $0x370] sm:$0xff] %v612
      %741 = vst [vmem:[%s170 + $0x378] sm:$0xff] %v613
      %742 = vst [vmem:[%s170 + $0x380] sm:$0xff] %v614
      %743 = vst [vmem:[%s170 + $0x388] sm:$0xff] %v615
      %744 = vst [vmem:[%s170 + $0x390] sm:$0xff] %v616
      %745 = vst [vmem:[%s170 + $0x398] sm:$0xff] %v617
      %746 = vst [vmem:[%s170 + $0x3a0] sm:$0xff] %v618
      %747 = vst [vmem:[%s170 + $0x3a8] sm:$0xff] %v619
      %748 = vst [vmem:[%s170 + $0x3b0] sm:$0xff] %v620
      %749 = vst [vmem:[%s170 + $0x3b8] sm:$0xff] %v621
      %750 = vst [vmem:[%s170 + $0x3c0] sm:$0xff] %v622
      %751 = vst [vmem:[%s170 + $0x3c8] sm:$0xff] %v623
      %752 = vst [vmem:[%s170 + $0x3d0] sm:$0xff] %v624
      %753 = vst [vmem:[%s170 + $0x3d8] sm:$0xff] %v625
      %754 = vst [vmem:[%s170 + $0x3e0] sm:$0xff] %v626
      %755 = vst [vmem:[%s170 + $0x3e8] sm:$0xff] %v627
      %756 = vst [vmem:[%s170 + $0x3f0] sm:$0xff] %v628
      %757 = vst [vmem:[%s170 + $0x3f8] sm:$0xff] %v629
      %p758 = scmp.lt.s32.totalorder %s14, 1
      %s759 = scalar_select %p758, %s14, 1
      %s760 = smul.addr %s759, 128
      %s761 = smul.addr %s760, 8
      %s762 = scalar_lea.vmem %s3, %s761
      // Predicated region
      $region33: #{se_block_3d.1} parent=31 // pred_check
        %p763 = pneg %p100
      $region34: #{se_block_3d.1} parent=31 // pred_check_branch
        %765 = sbr.rel (%p763) target = $region36
      $region35: #{se_block_3d.1} parent=31 // pred_region
        _
      $region36: #{se_block_3d.1} parent=31 // pred_fallthru
        _
    $region32: #{se_block_3d.1} parent=5 // pred_fallthru
      _
    %p766 = scmp.le.s32.totalorder 2, %s9
    // Predicated region
    $region37: #{se_block_3d.1} parent=5 // pred_check
      %p767 = pneg %p766
    $region38: #{se_block_3d.1} parent=5 // pred_check_branch
      %769 = sbr.rel (%p767) target = $region40
    $region39: #{se_block_3d.1} parent=5 // pred_region
      %s770 = ssub.s32 %s9, 2
      // Predicated region
      $region41: #{se_block_3d.1} parent=39 // pred_check
        %p771 = pneg %p106
      $region42: #{se_block_3d.1} parent=39 // pred_check_branch
        %773 = sbr.rel (%p771) target = $region44
      $region43: #{se_block_3d.1} parent=39 // pred_region
        %p774 = scmp.lt.s32.totalorder %s15, 1
        %s775 = scalar_select %p774, %s15, 1
        %s776 = smul.addr %s775, 128
        %s777 = smul.addr %s776, 8
        %s778 = scalar_lea.vmem %s3, %s777
      $region44: #{se_block_3d.1} parent=39 // pred_fallthru
        _
    $region40: #{se_block_3d.1} parent=5 // pred_fallthru
      _
  $region6: #{se_block_3d.1} parent=0 // loop_footer
    %s13 = sadd.s32 1, %s9
  $region7: #{se_block_3d.1} parent=0 // loop_footer_branch
    %8 = sbr.rel target = $region3
  $region8: #{se_block_3d.1} parent=0 // loop_exit
    _

</llo_original>
